<compile_context>
chip_gen: v7x
topology: tpu7x:2x2x1
jax: 0.10.0
libtpu: 0.0.40
codegen_flags: <defaults>
</compile_context>

<pallas_src>
import math

import jax
import jax.numpy as jnp
from jax.experimental import pallas as pl
from jax.experimental.pallas import tpu as pltpu

LANE = 128  # all feature / hidden / class widths are padded to one vreg lane width


def gcn_layer_kernel(a_ref, x_ref, w_ref, b_ref, h_ref, acc_ref):
    """One GCN layer: H = relu(Ahat @ (X @ W) + b), tiled over (rows, k)."""
    k = pl.program_id(1)

    @pl.when(k == 0)
    def _():
        acc_ref[...] = jnp.zeros_like(acc_ref)

    # Per-k-block neighbor features projected to the padded hidden width.
    # Contraction lengths here are tiny (<=128); the A @ M dot below is the
    # FLOP-heavy op (contraction over the node dimension).
    m = jnp.dot(x_ref[...], w_ref[...], preferred_element_type=jnp.float32)
    acc_ref[...] += jnp.dot(a_ref[...], m.astype(jnp.bfloat16),
                            preferred_element_type=jnp.float32)

    @pl.when(k == pl.num_programs(1) - 1)
    def _():
        h_ref[...] = jnp.maximum(acc_ref[...] + b_ref[...], 0.0).astype(h_ref.dtype)


def gcn_fc_kernel(a_ref, h1_ref, w2_ref, b2_ref, w3_ref, b3_ref, w4_ref, b4_ref,
                  out_ref, acc_ref):
    """GCN layer 2 fused with fc1(+relu) and fc2, tiled over (rows, k)."""
    k = pl.program_id(1)

    @pl.when(k == 0)
    def _():
        acc_ref[...] = jnp.zeros_like(acc_ref)

    m = jnp.dot(h1_ref[...], w2_ref[...], preferred_element_type=jnp.float32)
    acc_ref[...] += jnp.dot(a_ref[...], m.astype(jnp.bfloat16),
                            preferred_element_type=jnp.float32)

    @pl.when(k == pl.num_programs(1) - 1)
    def _():
        h = jnp.maximum(acc_ref[...] + b2_ref[...], 0.0)                  # [TM, 128] f32
        h = jnp.dot(h.astype(jnp.bfloat16), w3_ref[...],
                    preferred_element_type=jnp.float32) + b3_ref[...]      # fc1
        h = jnp.maximum(h, 0.0)
        out = jnp.dot(h.astype(jnp.bfloat16), w4_ref[...],
                      preferred_element_type=jnp.float32) + b4_ref[...]    # fc2
        out_ref[...] = out.astype(out_ref.dtype)                           # lane-dense store


def build_norm_adj(edge_index, num_nodes):
    """Dense Ahat = D^{-1/2} (A + I) D^{-1/2}, matching PyG GCNConv normalization."""
    src, dst = edge_index[0], edge_index[1]
    adj = jnp.zeros((num_nodes, num_nodes), jnp.float32)
    adj = adj.at[dst, src].set(1.0)                       # message flows src -> dst
    adj = adj + jnp.eye(num_nodes, dtype=jnp.float32)     # self loops
    deg = jnp.sum(adj, axis=1)
    dinv = jax.lax.rsqrt(deg)
    return dinv[:, None] * adj * dinv[None, :]


def _pad2(a, rows, cols, dtype):
    r, c = a.shape
    return jnp.pad(a.astype(dtype), ((0, rows - r), (0, cols - c)))


def _round_up(x, m):
    return (x + m - 1) // m * m


def less_simplified_gnn(x, edge_index, params, *, tile_rows=256, tile_k=256,
                        vmem_limit_bytes=48 * 1024 * 1024):
    """Forward pass. tile_rows/tile_k: use 256 on v6e/v7x, 128 on v5e."""
    n, _ = x.shape
    (w1, b1), (w2, b2), (w3, b3), (w4, b4) = params
    num_classes = w4.shape[1]

    n_pad = _round_up(n, math.lcm(tile_rows, tile_k))
    grid = (n_pad // tile_rows, n_pad // tile_k)

    # ---- pad everything to lane-dense (128-wide) bf16 operands ----
    a_hat = build_norm_adj(edge_index, n)
    a_p = _pad2(a_hat, n_pad, n_pad, jnp.bfloat16)
    x_p = _pad2(x, n_pad, LANE, jnp.bfloat16)

    w1_p = _pad2(w1, LANE, LANE, jnp.bfloat16)
    w2_p = _pad2(w2, LANE, LANE, jnp.bfloat16)
    w3_p = _pad2(w3, LANE, LANE, jnp.bfloat16)
    w4_p = _pad2(w4, LANE, LANE, jnp.bfloat16)
    b1_p = _pad2(b1, 1, LANE, jnp.float32)
    b2_p = _pad2(b2, 1, LANE, jnp.float32)
    b3_p = _pad2(b3, 1, LANE, jnp.float32)
    b4_p = _pad2(b4, 1, LANE, jnp.float32)

    cparams = pltpu.CompilerParams(
        dimension_semantics=("parallel", "arbitrary"),
        vmem_limit_bytes=vmem_limit_bytes,
    )

    a_spec = pl.BlockSpec((tile_rows, tile_k), lambda i, k: (i, k))
    feat_spec = pl.BlockSpec((tile_k, LANE), lambda i, k: (k, 0))
    w_spec = pl.BlockSpec((LANE, LANE), lambda i, k: (0, 0))
    b_spec = pl.BlockSpec((1, LANE), lambda i, k: (0, 0))
    row_out_spec = pl.BlockSpec((tile_rows, LANE), lambda i, k: (i, 0))

    # ---- layer 1: H1 = relu(Ahat @ (X @ W1) + b1), kept bf16 for layer 2 ----
    h1 = pl.pallas_call(
        gcn_layer_kernel,
        out_shape=jax.ShapeDtypeStruct((n_pad, LANE), jnp.bfloat16),
        grid_spec=pltpu.PrefetchScalarGridSpec(
            num_scalar_prefetch=0,
            grid=grid,
            in_specs=[a_spec, feat_spec, w_spec, b_spec],
            out_specs=row_out_spec,
            scratch_shapes=[pltpu.VMEM((tile_rows, LANE), jnp.float32)],
        ),
        compiler_params=cparams,
    )(a_p, x_p, w1_p, b1_p)

    # ---- layer 2 + fc1 + fc2, fused ----
    out_p = pl.pallas_call(
        gcn_fc_kernel,
        out_shape=jax.ShapeDtypeStruct((n_pad, LANE), jnp.float32),
        grid_spec=pltpu.PrefetchScalarGridSpec(
            num_scalar_prefetch=0,
            grid=grid,
            in_specs=[a_spec, feat_spec, w_spec, b_spec, w_spec, b_spec, w_spec, b_spec],
            out_specs=row_out_spec,
            scratch_shapes=[pltpu.VMEM((tile_rows, LANE), jnp.float32)],
        ),
        compiler_params=cparams,
    )(a_p, h1, w2_p, b2_p, w3_p, b3_p, w4_p, b4_p)

    # Slice the real nodes / classes back out (padding lives only in the kernel).
    return out_p[:n, :num_classes]


def init_params(key, num_features, num_classes):
    """Deterministic synthetic parameters (shapes from the module __init__)."""
    dims = [(num_features, 12), (12, 24), (24, 32), (32, num_classes)]
    params = []
    for i, (din, dout) in enumerate(dims):
        kw, kb = jax.random.split(jax.random.fold_in(key, i))
        w = jax.random.normal(kw, (din, dout), jnp.float32) * 0.1   # stored [in, out]
        b = jax.random.normal(kb, (1, dout), jnp.float32) * 0.01    # [1, out]
        params.append((w, b))
    return params


def reference_forward(x, edge_index, params):
    """Pure f32 JAX reference with the exact module semantics."""
    a_hat = build_norm_adj(edge_index, x.shape[0])
    (w1, b1), (w2, b2), (w3, b3), (w4, b4) = params
    h = jnp.maximum(a_hat @ (x @ w1) + b1, 0.0)
    h = jnp.maximum(a_hat @ (h @ w2) + b2, 0.0)
    h = jnp.maximum(h @ w3 + b3, 0.0)
    return h @ w4 + b4


if __name__ == "__main__":
    key = jax.random.PRNGKey(0)

    num_nodes = 8
    num_features = 4
    num_classes = 3

    # Deterministic node features.
    x = jax.random.normal(jax.random.fold_in(key, 100),
                          (num_nodes, num_features), jnp.float32)

    # Deterministic graph: undirected ring (both directions for each edge).
    src = jnp.arange(num_nodes, dtype=jnp.int32)
    dst = (src + 1) % num_nodes
    edge_index = jnp.stack([jnp.concatenate([src, dst]),
                            jnp.concatenate([dst, src])], axis=0)   # [2, 2N]

    params = init_params(jax.random.fold_in(key, 200), num_features, num_classes)

    out = less_simplified_gnn(x, edge_index, params)
    out = jax.block_until_ready(out)

    ref = reference_forward(x, edge_index, params)
    assert out.shape == (num_nodes, num_classes)
    # bf16 inputs / f32 accumulation: compare against the f32 reference with a
    # tolerance that covers the bf16 cast of Ahat / activations (~0.5% rel).
    assert jnp.allclose(out, ref, atol=3e-2, rtol=3e-2)

    print("KERNEL_OK")
</pallas_src>

<mosaic_0001>
module attributes {stable_mosaic.version = 11 : i64} {
  func.func @gcn_layer_kernel(%arg0: i32, %arg1: i32, %arg2: memref<256x256xbf16, #tpu.memory_space<vmem>>, %arg3: memref<256x128xbf16, #tpu.memory_space<vmem>>, %arg4: memref<128x128xbf16, #tpu.memory_space<vmem>>, %arg5: memref<1x128xf32, #tpu.memory_space<vmem>>, %arg6: memref<256x128xbf16, #tpu.memory_space<vmem>>, %arg7: memref<256x128xf32, #tpu.memory_space<vmem>>) attributes {dimension_semantics = [#tpu.dimension_semantics<parallel>, #tpu.dimension_semantics<arbitrary>], iteration_bounds = array<i64: 1, 1>, scalar_prefetch = 0 : i64, scratch_operands = 1 : i64, tpu.core_type = #tpu.core_type<tc>, window_params = [{transform_indices = @transform_0, window_bounds = array<i64: 256, 256>}, {transform_indices = @transform_1, window_bounds = array<i64: 256, 128>}, {pipeline_mode = #tpu.pipeline_mode<synchronous>, transform_indices = @transform_2, window_bounds = array<i64: 128, 128>}, {pipeline_mode = #tpu.pipeline_mode<synchronous>, transform_indices = @transform_3, window_bounds = array<i64: 1, 128>}, {transform_indices = @transform_4, window_bounds = array<i64: 256, 128>}]} {
    %c0_i32 = arith.constant 0 : i32
    %0 = arith.cmpi eq, %arg1, %c0_i32 : i32
    %1 = arith.extui %0 : i1 to i32
    %c0_i32_0 = arith.constant 0 : i32
    %2 = arith.cmpi ne, %1, %c0_i32_0 : i32
    scf.if %2 {
      %cst_13 = arith.constant 0.000000e+00 : f32
      %15 = vector.broadcast %cst_13 : f32 to vector<256x128xf32>
      %c0_14 = arith.constant 0 : index
      %c0_15 = arith.constant 0 : index
      %16 = vector.load %arg7[%c0_14, %c0_15] : memref<256x128xf32, #tpu.memory_space<vmem>>, vector<256x128xf32>
      tpu.vector_store %arg7[%c0_14, %c0_15], %15 {strides = array<i32>} : memref<256x128xf32, #tpu.memory_space<vmem>>, vector<256x128xf32>,
    } else {
    }
    %c0 = arith.constant 0 : index
    %c0_1 = arith.constant 0 : index
    %3 = vector.load %arg3[%c0, %c0_1] : memref<256x128xbf16, #tpu.memory_space<vmem>>, vector<256x128xbf16>
    %c0_2 = arith.constant 0 : index
    %c0_3 = arith.constant 0 : index
    %4 = vector.load %arg4[%c0_2, %c0_3] : memref<128x128xbf16, #tpu.memory_space<vmem>>, vector<128x128xbf16>
    %cst = arith.constant dense<0.000000e+00> : vector<256x128xf32>
    %5 = tpu.matmul %3, %4, %cst {dimension_numbers = #tpu.dot_dimension_numbers<[1], [0], [0], [1], [0, 0, 1, 1], [], []>} : vector<256x128xbf16>, vector<128x128xbf16>, vector<256x128xf32> -> vector<256x128xf32>
    %c0_4 = arith.constant 0 : index
    %c0_5 = arith.constant 0 : index
    %6 = vector.load %arg7[%c0_4, %c0_5] : memref<256x128xf32, #tpu.memory_space<vmem>>, vector<256x128xf32>
    %c0_6 = arith.constant 0 : index
    %c0_7 = arith.constant 0 : index
    %7 = vector.load %arg2[%c0_6, %c0_7] : memref<256x256xbf16, #tpu.memory_space<vmem>>, vector<256x256xbf16>
    %8 = arith.truncf %5 : vector<256x128xf32> to vector<256x128xbf16>
    %cst_8 = arith.constant dense<0.000000e+00> : vector<256x128xf32>
    %9 = tpu.matmul %7, %8, %cst_8 {dimension_numbers = #tpu.dot_dimension_numbers<[1], [0], [0], [1], [0, 0, 1, 1], [], []>} : vector<256x256xbf16>, vector<256x128xbf16>, vector<256x128xf32> -> vector<256x128xf32>
    %10 = arith.addf %6, %9 : vector<256x128xf32>
    %c0_9 = arith.constant 0 : index
    %c0_10 = arith.constant 0 : index
    %11 = vector.load %arg7[%c0_9, %c0_10] : memref<256x128xf32, #tpu.memory_space<vmem>>, vector<256x128xf32>
    tpu.vector_store %arg7[%c0_9, %c0_10], %10 {strides = array<i32>} : memref<256x128xf32, #tpu.memory_space<vmem>>, vector<256x128xf32>,
    %c0_i32_11 = arith.constant 0 : i32
    %12 = arith.cmpi eq, %arg1, %c0_i32_11 : i32
    %13 = arith.extui %12 : i1 to i32
    %c0_i32_12 = arith.constant 0 : i32
    %14 = arith.cmpi ne, %13, %c0_i32_12 : i32
    scf.if %14 {
      %c0_13 = arith.constant 0 : index
      %c0_14 = arith.constant 0 : index
      %15 = vector.load %arg7[%c0_13, %c0_14] : memref<256x128xf32, #tpu.memory_space<vmem>>, vector<256x128xf32>
      %c0_15 = arith.constant 0 : index
      %c0_16 = arith.constant 0 : index
      %16 = vector.load %arg5[%c0_15, %c0_16] : memref<1x128xf32, #tpu.memory_space<vmem>>, vector<1x128xf32>
      %17 = vector.broadcast %16 : vector<1x128xf32> to vector<256x128xf32>
      %18 = arith.addf %15, %17 : vector<256x128xf32>
      %cst_17 = arith.constant 0.000000e+00 : f32
      %19 = vector.broadcast %cst_17 : f32 to vector<256x128xf32>
      %20 = arith.maximumf %18, %19 : vector<256x128xf32>
      %21 = arith.truncf %20 : vector<256x128xf32> to vector<256x128xbf16>
      %c0_18 = arith.constant 0 : index
      %c0_19 = arith.constant 0 : index
      %22 = vector.load %arg6[%c0_18, %c0_19] : memref<256x128xbf16, #tpu.memory_space<vmem>>, vector<256x128xbf16>
      tpu.vector_store %arg6[%c0_18, %c0_19], %21 {strides = array<i32>} : memref<256x128xbf16, #tpu.memory_space<vmem>>, vector<256x128xbf16>,
    } else {
    }
    return
  }
  func.func @transform_0(%arg0: i32, %arg1: i32) -> (i32, i32) {
    %c0_i32 = arith.constant 0 : i32
    return %arg0, %arg1 : i32, i32
  }
  func.func @transform_1(%arg0: i32, %arg1: i32) -> (i32, i32) {
    %c0_i32 = arith.constant 0 : i32
    %c0_i32_0 = arith.constant 0 : i32
    return %arg1, %c0_i32 : i32, i32
  }
  func.func @transform_2(%arg0: i32, %arg1: i32) -> (i32, i32) {
    %c0_i32 = arith.constant 0 : i32
    %c0_i32_0 = arith.constant 0 : i32
    %c0_i32_1 = arith.constant 0 : i32
    return %c0_i32, %c0_i32_0 : i32, i32
  }
  func.func @transform_3(%arg0: i32, %arg1: i32) -> (i32, i32) {
    %c0_i32 = arith.constant 0 : i32
    %c0_i32_0 = arith.constant 0 : i32
    %c0_i32_1 = arith.constant 0 : i32
    return %c0_i32, %c0_i32_0 : i32, i32
  }
  func.func @transform_4(%arg0: i32, %arg1: i32) -> (i32, i32) {
    %c0_i32 = arith.constant 0 : i32
    %c0_i32_0 = arith.constant 0 : i32
    return %arg0, %c0_i32 : i32, i32
  }
}

</mosaic_0001>

<llo_original>
// kernel: tpu_custom_call.1
$region0: #{tpu_custom_call.1}
  #allocation0 [shape = 'u32[]', space=smem, size = 0x4, offset = 0x4, fixed_abs, tag = 'smem constant byte address 0x4 - core index']
  #allocation1 [shape = 'u32[144,128]{1,0:T(1,128)}', space=vmem, size = 0x12000, scoped, tag = 'internal scratch']
  #allocation2 [shape = 'f32[256,128]{1,0:T(8,128)}', space=vmem, size = 0x20000, scoped, tag = 'scratch operand']
  %s0 = inlined_call_operand.hbm [shape: bf16[256,256], index: 0, kind: input, shape index: {}]
  %s1 = inlined_call_operand.hbm [shape: bf16[256,128], index: 1, kind: input, shape index: {}]
  %s2 = inlined_call_operand.hbm [shape: bf16[128,128], index: 2, kind: input, shape index: {}]
  %s3 = inlined_call_operand.vmem [shape: f32[1,128], index: 3, kind: input, shape index: {}]
  %s4 = inlined_call_operand.hbm [shape: bf16[256,128], index: 4, kind: output, shape index: {}]
  %s5 = sld [smem:[#allocation0]]
  $region46: #{tpu_custom_call.1} parent=0
    _
  %s7 = ssub.s32 1, %s5
  %s8 = scalar_select 0, %s7, %s5
  $region1: #{tpu_custom_call.1} parent=0
    #allocation3 [shape = 'u8[131072]{0}', space=vmem, size = 0x20000, scoped, tag = 'input window, operand 0, single buffered']
    #allocation4 [shape = 's32[1]{0}', space=sflag, size = 0x4, scoped, tag = 'scoped memory for tpu_custom_call.1']
    #allocation5 [shape = 's32[1]{0}', space=sflag, size = 0x4, scoped, tag = 'scoped memory for tpu_custom_call.1']
    #allocation6 [shape = 'u8[65536]{0}', space=vmem, size = 0x10000, scoped, tag = 'input window, operand 1, single buffered']
    #allocation7 [shape = 's32[1]{0}', space=sflag, size = 0x4, scoped, tag = 'scoped memory for tpu_custom_call.1']
    #allocation8 [shape = 'u8[32768]{0}', space=vmem, size = 0x8000, scoped, tag = 'input window, operand 2, single buffered']
    #allocation9 [shape = 'u8[65536]{0}', space=vmem, size = 0x10000, scoped, tag = 'output window, operand 0, single buffered']
    %9 = vsyncpa [#allocation4], 0
    %10 = vsyncpa [#allocation7], 0
    %11 = vsyncpa [#allocation5], 0
    // Predicated region
    $region2: #{tpu_custom_call.1} parent=1 // pred_check
      _
    $region3: #{tpu_custom_call.1} parent=1 // pred_check_branch
      %13 = sbr.rel (0) target = $region5
    $region4: #{tpu_custom_call.1} parent=1 // pred_region
      %s15 = ssub.s32 4096, 4096
      %16 = vsyncadd [#allocation4], %s15
      %s17 = sshll.u32 [#allocation3], 4
      %s18 = int_to_ptr.vmem [resolvable:$true] %s17
      %23 = dma.hbm_to_vmem [thread:$0]  %s0, 4096, %s18, [#allocation4], 128, 128, 8
    $region5: #{tpu_custom_call.1} parent=1 // pred_fallthru
      _
    // Predicated region
    $region6: #{tpu_custom_call.1} parent=1 // pred_check
      _
    $region7: #{tpu_custom_call.1} parent=1 // pred_check_branch
      %25 = sbr.rel (0) target = $region9
    $region8: #{tpu_custom_call.1} parent=1 // pred_region
      %s27 = ssub.s32 2048, 2048
      %28 = vsyncadd [#allocation7], %s27
      %s29 = sshll.u32 [#allocation6], 4
      %s30 = int_to_ptr.vmem [resolvable:$true] %s29
      %35 = dma.hbm_to_vmem [thread:$0]  %s1, 2048, %s30, [#allocation7], 64, 64, 4
    $region9: #{tpu_custom_call.1} parent=1 // pred_fallthru
      _
    // Predicated region
    $region10: #{tpu_custom_call.1} parent=1 // pred_check
      _
    $region11: #{tpu_custom_call.1} parent=1 // pred_check_branch
      %37 = sbr.rel (0) target = $region13
    $region12: #{tpu_custom_call.1} parent=1 // pred_region
      %s39 = ssub.s32 1024, 1024
      %40 = vsyncadd [#allocation7], %s39
      %s41 = sshll.u32 [#allocation8], 4
      %s42 = int_to_ptr.vmem [resolvable:$true] %s41
      %47 = dma.hbm_to_vmem [thread:$0]  %s2, 1024, %s42, [#allocation7], 64, 64, 4
    $region13: #{tpu_custom_call.1} parent=1 // pred_fallthru
      _
    // Predicated region
    $region14: #{tpu_custom_call.1} parent=1 // pred_check
      _
    $region15: #{tpu_custom_call.1} parent=1 // pred_check_branch
      %49 = sbr.rel (0) target = $region17
    $region16: #{tpu_custom_call.1} parent=1 // pred_region
      _
    $region17: #{tpu_custom_call.1} parent=1 // pred_fallthru
      _
    // Predicated region
    $region18: #{tpu_custom_call.1} parent=1 // pred_check
      _
    $region19: #{tpu_custom_call.1} parent=1 // pred_check_branch
      %51 = sbr.rel (0) target = $region21
    $region20: #{tpu_custom_call.1} parent=1 // pred_region
      %52 = dma.done [#allocation4], 4096
    $region21: #{tpu_custom_call.1} parent=1 // pred_fallthru
      _
    // Predicated region
    $region22: #{tpu_custom_call.1} parent=1 // pred_check
      _
    $region23: #{tpu_custom_call.1} parent=1 // pred_check_branch
      %54 = sbr.rel (0) target = $region25
    $region24: #{tpu_custom_call.1} parent=1 // pred_region
      %55 = dma.done [#allocation7], 2048
    $region25: #{tpu_custom_call.1} parent=1 // pred_fallthru
      _
    // Predicated region
    $region26: #{tpu_custom_call.1} parent=1 // pred_check
      _
    $region27: #{tpu_custom_call.1} parent=1 // pred_check_branch
      %57 = sbr.rel (0) target = $region29
    $region28: #{tpu_custom_call.1} parent=1 // pred_region
      %58 = dma.done [#allocation7], 1024
    $region29: #{tpu_custom_call.1} parent=1 // pred_fallthru
      _
    %p60 = scmp.eq.s32.totalorder 0, 0
    // Predicated region
    $region30: #{tpu_custom_call.1} parent=1 // pred_check
      %p61 = pneg %p60
    $region31: #{tpu_custom_call.1} parent=1 // pred_check_branch
      %63 = sbr.rel (%p61) target = $region33
    $region32: #{tpu_custom_call.1} parent=1 // pred_region
      %64 = vst [vmem:[#allocation2] sm:$0xff] 0.0
      %65 = vst [vmem:[#allocation2 + $0x8] sm:$0xff] 0.0
      %66 = vst [vmem:[#allocation2 + $0x10] sm:$0xff] 0.0
      %67 = vst [vmem:[#allocation2 + $0x18] sm:$0xff] 0.0
      %68 = vst [vmem:[#allocation2 + $0x20] sm:$0xff] 0.0
      %69 = vst [vmem:[#allocation2 + $0x28] sm:$0xff] 0.0
      %70 = vst [vmem:[#allocation2 + $0x30] sm:$0xff] 0.0
      %71 = vst [vmem:[#allocation2 + $0x38] sm:$0xff] 0.0
      %72 = vst [vmem:[#allocation2 + $0x40] sm:$0xff] 0.0
      %73 = vst [vmem:[#allocation2 + $0x48] sm:$0xff] 0.0
      %74 = vst [vmem:[#allocation2 + $0x50] sm:$0xff] 0.0
      %75 = vst [vmem:[#allocation2 + $0x58] sm:$0xff] 0.0
      %76 = vst [vmem:[#allocation2 + $0x60] sm:$0xff] 0.0
      %77 = vst [vmem:[#allocation2 + $0x68] sm:$0xff] 0.0
      %78 = vst [vmem:[#allocation2 + $0x70] sm:$0xff] 0.0
      %79 = vst [vmem:[#allocation2 + $0x78] sm:$0xff] 0.0
      %80 = vst [vmem:[#allocation2 + $0x80] sm:$0xff] 0.0
      %81 = vst [vmem:[#allocation2 + $0x88] sm:$0xff] 0.0
      %82 = vst [vmem:[#allocation2 + $0x90] sm:$0xff] 0.0
      %83 = vst [vmem:[#allocation2 + $0x98] sm:$0xff] 0.0
      %84 = vst [vmem:[#allocation2 + $0xa0] sm:$0xff] 0.0
      %85 = vst [vmem:[#allocation2 + $0xa8] sm:$0xff] 0.0
      %86 = vst [vmem:[#allocation2 + $0xb0] sm:$0xff] 0.0
      %87 = vst [vmem:[#allocation2 + $0xb8] sm:$0xff] 0.0
      %88 = vst [vmem:[#allocation2 + $0xc0] sm:$0xff] 0.0
      %89 = vst [vmem:[#allocation2 + $0xc8] sm:$0xff] 0.0
      %90 = vst [vmem:[#allocation2 + $0xd0] sm:$0xff] 0.0
      %91 = vst [vmem:[#allocation2 + $0xd8] sm:$0xff] 0.0
      %92 = vst [vmem:[#allocation2 + $0xe0] sm:$0xff] 0.0
      %93 = vst [vmem:[#allocation2 + $0xe8] sm:$0xff] 0.0
      %94 = vst [vmem:[#allocation2 + $0xf0] sm:$0xff] 0.0
      %95 = vst [vmem:[#allocation2 + $0xf8] sm:$0xff] 0.0
    $region33: #{tpu_custom_call.1} parent=1 // pred_fallthru
      _
    %v96 = vld [vmem:[#allocation6] sm:$0xf]
    %v97 = vld [vmem:[#allocation6 + $0x4] sm:$0xf]
    %v98 = vld [vmem:[#allocation6 + $0x8] sm:$0xf]
    %v99 = vld [vmem:[#allocation6 + $0xc] sm:$0xf]
    %v100 = vld [vmem:[#allocation6 + $0x10] sm:$0xf]
    %v101 = vld [vmem:[#allocation6 + $0x14] sm:$0xf]
    %v102 = vld [vmem:[#allocation6 + $0x18] sm:$0xf]
    %v103 = vld [vmem:[#allocation6 + $0x1c] sm:$0xf]
    %v104 = vld [vmem:[#allocation6 + $0x20] sm:$0xf]
    %v105 = vld [vmem:[#allocation6 + $0x24] sm:$0xf]
    %v106 = vld [vmem:[#allocation6 + $0x28] sm:$0xf]
    %v107 = vld [vmem:[#allocation6 + $0x2c] sm:$0xf]
    %v108 = vld [vmem:[#allocation6 + $0x30] sm:$0xf]
    %v109 = vld [vmem:[#allocation6 + $0x34] sm:$0xf]
    %v110 = vld [vmem:[#allocation6 + $0x38] sm:$0xf]
    %v111 = vld [vmem:[#allocation6 + $0x3c] sm:$0xf]
    %v112 = vld [vmem:[#allocation6 + $0x40] sm:$0xf]
    %v113 = vld [vmem:[#allocation6 + $0x44] sm:$0xf]
    %v114 = vld [vmem:[#allocation6 + $0x48] sm:$0xf]
    %v115 = vld [vmem:[#allocation6 + $0x4c] sm:$0xf]
    %v116 = vld [vmem:[#allocation6 + $0x50] sm:$0xf]
    %v117 = vld [vmem:[#allocation6 + $0x54] sm:$0xf]
    %v118 = vld [vmem:[#allocation6 + $0x58] sm:$0xf]
    %v119 = vld [vmem:[#allocation6 + $0x5c] sm:$0xf]
    %v120 = vld [vmem:[#allocation6 + $0x60] sm:$0xf]
    %v121 = vld [vmem:[#allocation6 + $0x64] sm:$0xf]
    %v122 = vld [vmem:[#allocation6 + $0x68] sm:$0xf]
    %v123 = vld [vmem:[#allocation6 + $0x6c] sm:$0xf]
    %v124 = vld [vmem:[#allocation6 + $0x70] sm:$0xf]
    %v125 = vld [vmem:[#allocation6 + $0x74] sm:$0xf]
    %v126 = vld [vmem:[#allocation6 + $0x78] sm:$0xf]
    %v127 = vld [vmem:[#allocation6 + $0x7c] sm:$0xf]
    %v128 = vld [vmem:[#allocation8] sm:$0xf]
    %v129 = vld [vmem:[#allocation8 + $0x4] sm:$0xf]
    %v130 = vld [vmem:[#allocation8 + $0x8] sm:$0xf]
    %v131 = vld [vmem:[#allocation8 + $0xc] sm:$0xf]
    %v132 = vld [vmem:[#allocation8 + $0x10] sm:$0xf]
    %v133 = vld [vmem:[#allocation8 + $0x14] sm:$0xf]
    %v134 = vld [vmem:[#allocation8 + $0x18] sm:$0xf]
    %v135 = vld [vmem:[#allocation8 + $0x1c] sm:$0xf]
    %v136 = vld [vmem:[#allocation8 + $0x20] sm:$0xf]
    %v137 = vld [vmem:[#allocation8 + $0x24] sm:$0xf]
    %v138 = vld [vmem:[#allocation8 + $0x28] sm:$0xf]
    %v139 = vld [vmem:[#allocation8 + $0x2c] sm:$0xf]
    %v140 = vld [vmem:[#allocation8 + $0x30] sm:$0xf]
    %v141 = vld [vmem:[#allocation8 + $0x34] sm:$0xf]
    %v142 = vld [vmem:[#allocation8 + $0x38] sm:$0xf]
    %v143 = vld [vmem:[#allocation8 + $0x3c] sm:$0xf]
    %v176 = vunpack.c.l.b16 %v96
    %v177 = vunpack.c.l.b16 %v97
    %v178 = vunpack.c.l.b16 %v98
    %v179 = vunpack.c.l.b16 %v99
    %v180 = vunpack.c.l.b16 %v100
    %v181 = vunpack.c.l.b16 %v101
    %v182 = vunpack.c.l.b16 %v102
    %v183 = vunpack.c.l.b16 %v103
    %v184 = vunpack.c.l.b16 %v104
    %v185 = vunpack.c.l.b16 %v105
    %v186 = vunpack.c.l.b16 %v106
    %v187 = vunpack.c.l.b16 %v107
    %v188 = vunpack.c.l.b16 %v108
    %v189 = vunpack.c.l.b16 %v109
    %v190 = vunpack.c.l.b16 %v110
    %v191 = vunpack.c.l.b16 %v111
    %v192 = vunpack.c.l.b16 %v112
    %v193 = vunpack.c.l.b16 %v113
    %v194 = vunpack.c.l.b16 %v114
    %v195 = vunpack.c.l.b16 %v115
    %v196 = vunpack.c.l.b16 %v116
    %v197 = vunpack.c.l.b16 %v117
    %v198 = vunpack.c.l.b16 %v118
    %v199 = vunpack.c.l.b16 %v119
    %v200 = vunpack.c.l.b16 %v120
    %v201 = vunpack.c.l.b16 %v121
    %v202 = vunpack.c.l.b16 %v122
    %v203 = vunpack.c.l.b16 %v123
    %v204 = vunpack.c.l.b16 %v124
    %v205 = vunpack.c.l.b16 %v125
    %v206 = vunpack.c.l.b16 %v126
    %v207 = vunpack.c.l.b16 %v127
    %v208 = vpack.c.b16 %v177, %v176
    %v209 = vpack.c.b16 %v179, %v178
    %v210 = vpack.c.b16 %v181, %v180
    %v211 = vpack.c.b16 %v183, %v182
    %v212 = vpack.c.b16 %v185, %v184
    %v213 = vpack.c.b16 %v187, %v186
    %v214 = vpack.c.b16 %v189, %v188
    %v215 = vpack.c.b16 %v191, %v190
    %v216 = vpack.c.b16 %v193, %v192
    %v217 = vpack.c.b16 %v195, %v194
    %v218 = vpack.c.b16 %v197, %v196
    %v219 = vpack.c.b16 %v199, %v198
    %v220 = vpack.c.b16 %v201, %v200
    %v221 = vpack.c.b16 %v203, %v202
    %v222 = vpack.c.b16 %v205, %v204
    %v223 = vpack.c.b16 %v207, %v206
    %v256 = vunpack.c.l.b16 %v128
    %v257 = vunpack.c.l.b16 %v129
    %v258 = vunpack.c.l.b16 %v130
    %v259 = vunpack.c.l.b16 %v131
    %v260 = vunpack.c.l.b16 %v132
    %v261 = vunpack.c.l.b16 %v133
    %v262 = vunpack.c.l.b16 %v134
    %v263 = vunpack.c.l.b16 %v135
    %v264 = vunpack.c.l.b16 %v136
    %v265 = vunpack.c.l.b16 %v137
    %v266 = vunpack.c.l.b16 %v138
    %v267 = vunpack.c.l.b16 %v139
    %v268 = vunpack.c.l.b16 %v140
    %v269 = vunpack.c.l.b16 %v141
    %v270 = vunpack.c.l.b16 %v142
    %v271 = vunpack.c.l.b16 %v143
    %v272 = vpack.c.b16 %v257, %v256
    %v273 = vpack.c.b16 %v259, %v258
    %v274 = vpack.c.b16 %v261, %v260
    %v275 = vpack.c.b16 %v263, %v262
    %v276 = vpack.c.b16 %v265, %v264
    %v277 = vpack.c.b16 %v267, %v266
    %v278 = vpack.c.b16 %v269, %v268
    %v279 = vpack.c.b16 %v271, %v270
    %288 = vmatprep.subr.bf16.mxu0 0
    %289 = vmatpush1.bf16.msra.mxu0 %v272
    %290 = vmatprep.subr.bf16.mxu0 0
    %291 = vmatpush1.bf16.msra.mxu0 %v273
    %292 = vmatprep.subr.bf16.mxu0 0
    %293 = vmatpush1.bf16.msra.mxu0 %v274
    %294 = vmatprep.subr.bf16.mxu0 0
    %295 = vmatpush1.bf16.msra.mxu0 %v275
    %296 = vmatprep.subr.bf16.mxu0 0
    %297 = vmatpush1.bf16.msra.mxu0 %v276
    %298 = vmatprep.subr.bf16.mxu0 0
    %299 = vmatpush1.bf16.msra.mxu0 %v277
    %300 = vmatprep.subr.bf16.mxu0 0
    %301 = vmatpush1.bf16.msra.mxu0 %v278
    %302 = vmatprep.subr.bf16.mxu0 0
    %303 = vmatpush1.bf16.msra.mxu0 %v279
    %304 = vmatprep.subr.bf16.mxu0 0
    %305 = vmatpush1.bf16.msra.mxu0 0
    %306 = vmatprep.subr.bf16.mxu0 0
    %307 = vmatpush1.bf16.msra.mxu0 0
    %308 = vmatprep.subr.bf16.mxu0 0
    %309 = vmatpush1.bf16.msra.mxu0 0
    %310 = vmatprep.subr.bf16.mxu0 0
    %311 = vmatpush1.bf16.msra.mxu0 0
    %312 = vmatprep.subr.bf16.mxu0 0
    %313 = vmatpush1.bf16.msra.mxu0 0
    %314 = vmatprep.subr.bf16.mxu0 0
    %315 = vmatpush1.bf16.msra.mxu0 0
    %316 = vmatprep.subr.bf16.mxu0 0
    %317 = vmatpush1.bf16.msra.mxu0 0
    %318 = vmatprep.subr.bf16.mxu0 0
    %319 = vmatpush1.bf16.msra.mxu0 0
    %320 = vmatprep.mubr.bf16.mxu0 0
    %321 = vmatmul.mubr.bf16.gmra.mrb[0].mxu0 %v208
    %v322 = vpop.f32.mrb[0].mxu0
    %v323 = vadd.f32 0.0, %v322
    %v324 = vpop.f32.mrb[0].mxu0
    %v325 = vpop.f32.mrb[0].mxu0
    %v326 = vadd.f32 0.0, %v325
    %v327 = vpop.f32.mrb[0].mxu0
    %328 = vmatprep.mubr.bf16.mxu0 0
    %329 = vmatmul.mubr.bf16.gmra.mrb[0].mxu0 %v209
    %v330 = vpop.f32.mrb[0].mxu0
    %v331 = vadd.f32 0.0, %v330
    %v332 = vpop.f32.mrb[0].mxu0
    %v333 = vpop.f32.mrb[0].mxu0
    %v334 = vadd.f32 0.0, %v333
    %v335 = vpop.f32.mrb[0].mxu0
    %336 = vmatprep.mubr.bf16.mxu0 0
    %337 = vmatmul.mubr.bf16.gmra.mrb[0].mxu0 %v210
    %v338 = vpop.f32.mrb[0].mxu0
    %v339 = vadd.f32 0.0, %v338
    %v340 = vpop.f32.mrb[0].mxu0
    %v341 = vpop.f32.mrb[0].mxu0
    %v342 = vadd.f32 0.0, %v341
    %v343 = vpop.f32.mrb[0].mxu0
    %344 = vmatprep.mubr.bf16.mxu0 0
    %345 = vmatmul.mubr.bf16.gmra.mrb[0].mxu0 %v211
    %v346 = vpop.f32.mrb[0].mxu0
    %v347 = vadd.f32 0.0, %v346
    %v348 = vpop.f32.mrb[0].mxu0
    %v349 = vpop.f32.mrb[0].mxu0
    %v350 = vadd.f32 0.0, %v349
    %v351 = vpop.f32.mrb[0].mxu0
    %352 = vmatprep.mubr.bf16.mxu0 0
    %353 = vmatmul.mubr.bf16.gmra.mrb[0].mxu0 %v212
    %v354 = vpop.f32.mrb[0].mxu0
    %v355 = vadd.f32 0.0, %v354
    %v356 = vpop.f32.mrb[0].mxu0
    %v357 = vpop.f32.mrb[0].mxu0
    %v358 = vadd.f32 0.0, %v357
    %v359 = vpop.f32.mrb[0].mxu0
    %360 = vmatprep.mubr.bf16.mxu0 0
    %361 = vmatmul.mubr.bf16.gmra.mrb[0].mxu0 %v213
    %v362 = vpop.f32.mrb[0].mxu0
    %v363 = vadd.f32 0.0, %v362
    %v364 = vpop.f32.mrb[0].mxu0
    %v365 = vpop.f32.mrb[0].mxu0
    %v366 = vadd.f32 0.0, %v365
    %v367 = vpop.f32.mrb[0].mxu0
    %368 = vmatprep.mubr.bf16.mxu0 0
    %369 = vmatmul.mubr.bf16.gmra.mrb[0].mxu0 %v214
    %v370 = vpop.f32.mrb[0].mxu0
    %v371 = vadd.f32 0.0, %v370
    %v372 = vpop.f32.mrb[0].mxu0
    %v373 = vpop.f32.mrb[0].mxu0
    %v374 = vadd.f32 0.0, %v373
    %v375 = vpop.f32.mrb[0].mxu0
    %376 = vmatprep.mubr.bf16.mxu0 0
    %377 = vmatmul.mubr.bf16.gmra.mrb[0].mxu0 %v215
    %v378 = vpop.f32.mrb[0].mxu0
    %v379 = vadd.f32 0.0, %v378
    %v380 = vpop.f32.mrb[0].mxu0
    %v381 = vpop.f32.mrb[0].mxu0
    %v382 = vadd.f32 0.0, %v381
    %v383 = vpop.f32.mrb[0].mxu0
    %384 = vmatprep.mubr.bf16.mxu0 0
    %385 = vmatmul.mubr.bf16.gmra.mrb[0].mxu0 %v216
    %v386 = vpop.f32.mrb[0].mxu0
    %v387 = vadd.f32 0.0, %v386
    %v388 = vpop.f32.mrb[0].mxu0
    %v389 = vpop.f32.mrb[0].mxu0
    %v390 = vadd.f32 0.0, %v389
    %v391 = vpop.f32.mrb[0].mxu0
    %392 = vmatprep.mubr.bf16.mxu0 0
    %393 = vmatmul.mubr.bf16.gmra.mrb[0].mxu0 %v217
    %v394 = vpop.f32.mrb[0].mxu0
    %v395 = vadd.f32 0.0, %v394
    %v396 = vpop.f32.mrb[0].mxu0
    %v397 = vpop.f32.mrb[0].mxu0
    %v398 = vadd.f32 0.0, %v397
    %v399 = vpop.f32.mrb[0].mxu0
    %400 = vmatprep.mubr.bf16.mxu0 0
    %401 = vmatmul.mubr.bf16.gmra.mrb[0].mxu0 %v218
    %v402 = vpop.f32.mrb[0].mxu0
    %v403 = vadd.f32 0.0, %v402
    %v404 = vpop.f32.mrb[0].mxu0
    %v405 = vpop.f32.mrb[0].mxu0
    %v406 = vadd.f32 0.0, %v405
    %v407 = vpop.f32.mrb[0].mxu0
    %408 = vmatprep.mubr.bf16.mxu0 0
    %409 = vmatmul.mubr.bf16.gmra.mrb[0].mxu0 %v219
    %v410 = vpop.f32.mrb[0].mxu0
    %v411 = vadd.f32 0.0, %v410
    %v412 = vpop.f32.mrb[0].mxu0
    %v413 = vpop.f32.mrb[0].mxu0
    %v414 = vadd.f32 0.0, %v413
    %v415 = vpop.f32.mrb[0].mxu0
    %416 = vmatprep.mubr.bf16.mxu0 0
    %417 = vmatmul.mubr.bf16.gmra.mrb[0].mxu0 %v220
    %v418 = vpop.f32.mrb[0].mxu0
    %v419 = vadd.f32 0.0, %v418
    %v420 = vpop.f32.mrb[0].mxu0
    %v421 = vpop.f32.mrb[0].mxu0
    %v422 = vadd.f32 0.0, %v421
    %v423 = vpop.f32.mrb[0].mxu0
    %424 = vmatprep.mubr.bf16.mxu0 0
    %425 = vmatmul.mubr.bf16.gmra.mrb[0].mxu0 %v221
    %v426 = vpop.f32.mrb[0].mxu0
    %v427 = vadd.f32 0.0, %v426
    %v428 = vpop.f32.mrb[0].mxu0
    %v429 = vpop.f32.mrb[0].mxu0
    %v430 = vadd.f32 0.0, %v429
    %v431 = vpop.f32.mrb[0].mxu0
    %432 = vmatprep.mubr.bf16.mxu0 0
    %433 = vmatmul.mubr.bf16.gmra.mrb[0].mxu0 %v222
    %v434 = vpop.f32.mrb[0].mxu0
    %v435 = vadd.f32 0.0, %v434
    %v436 = vpop.f32.mrb[0].mxu0
    %v437 = vpop.f32.mrb[0].mxu0
    %v438 = vadd.f32 0.0, %v437
    %v439 = vpop.f32.mrb[0].mxu0
    %440 = vmatprep.mubr.bf16.mxu0 0
    %441 = vmatmul.mubr.bf16.gmra.mrb[0].mxu0 %v223
    %v442 = vpop.f32.mrb[0].mxu0
    %v443 = vadd.f32 0.0, %v442
    %v444 = vpop.f32.mrb[0].mxu0
    %v445 = vpop.f32.mrb[0].mxu0
    %v446 = vadd.f32 0.0, %v445
    %v447 = vpop.f32.mrb[0].mxu0
    %448 = vdwg.mxu0
    %v449 = vld [vmem:[#allocation2] sm:$0xff]
    %v450 = vld [vmem:[#allocation2 + $0x8] sm:$0xff]
    %v451 = vld [vmem:[#allocation2 + $0x10] sm:$0xff]
    %v452 = vld [vmem:[#allocation2 + $0x18] sm:$0xff]
    %v453 = vld [vmem:[#allocation2 + $0x20] sm:$0xff]
    %v454 = vld [vmem:[#allocation2 + $0x28] sm:$0xff]
    %v455 = vld [vmem:[#allocation2 + $0x30] sm:$0xff]
    %v456 = vld [vmem:[#allocation2 + $0x38] sm:$0xff]
    %v457 = vld [vmem:[#allocation2 + $0x40] sm:$0xff]
    %v458 = vld [vmem:[#allocation2 + $0x48] sm:$0xff]
    %v459 = vld [vmem:[#allocation2 + $0x50] sm:$0xff]
    %v460 = vld [vmem:[#allocation2 + $0x58] sm:$0xff]
    %v461 = vld [vmem:[#allocation2 + $0x60] sm:$0xff]
    %v462 = vld [vmem:[#allocation2 + $0x68] sm:$0xff]
    %v463 = vld [vmem:[#allocation2 + $0x70] sm:$0xff]
    %v464 = vld [vmem:[#allocation2 + $0x78] sm:$0xff]
    %v465 = vld [vmem:[#allocation2 + $0x80] sm:$0xff]
    %v466 = vld [vmem:[#allocation2 + $0x88] sm:$0xff]
    %v467 = vld [vmem:[#allocation2 + $0x90] sm:$0xff]
    %v468 = vld [vmem:[#allocation2 + $0x98] sm:$0xff]
    %v469 = vld [vmem:[#allocation2 + $0xa0] sm:$0xff]
    %v470 = vld [vmem:[#allocation2 + $0xa8] sm:$0xff]
    %v471 = vld [vmem:[#allocation2 + $0xb0] sm:$0xff]
    %v472 = vld [vmem:[#allocation2 + $0xb8] sm:$0xff]
    %v473 = vld [vmem:[#allocation2 + $0xc0] sm:$0xff]
    %v474 = vld [vmem:[#allocation2 + $0xc8] sm:$0xff]
    %v475 = vld [vmem:[#allocation2 + $0xd0] sm:$0xff]
    %v476 = vld [vmem:[#allocation2 + $0xd8] sm:$0xff]
    %v477 = vld [vmem:[#allocation2 + $0xe0] sm:$0xff]
    %v478 = vld [vmem:[#allocation2 + $0xe8] sm:$0xff]
    %v479 = vld [vmem:[#allocation2 + $0xf0] sm:$0xff]
    %v480 = vld [vmem:[#allocation2 + $0xf8] sm:$0xff]
    %v481 = vld [vmem:[#allocation3] sm:$0xff]
    %v482 = vld [vmem:[#allocation3 + $0x8] sm:$0xff]
    %v483 = vld [vmem:[#allocation3 + $0x10] sm:$0xff]
    %v484 = vld [vmem:[#allocation3 + $0x18] sm:$0xff]
    %v485 = vld [vmem:[#allocation3 + $0x20] sm:$0xff]
    %v486 = vld [vmem:[#allocation3 + $0x28] sm:$0xff]
    %v487 = vld [vmem:[#allocation3 + $0x30] sm:$0xff]
    %v488 = vld [vmem:[#allocation3 + $0x38] sm:$0xff]
    %v489 = vld [vmem:[#allocation3 + $0x40] sm:$0xff]
    %v490 = vld [vmem:[#allocation3 + $0x48] sm:$0xff]
    %v491 = vld [vmem:[#allocation3 + $0x50] sm:$0xff]
    %v492 = vld [vmem:[#allocation3 + $0x58] sm:$0xff]
    %v493 = vld [vmem:[#allocation3 + $0x60] sm:$0xff]
    %v494 = vld [vmem:[#allocation3 + $0x68] sm:$0xff]
    %v495 = vld [vmem:[#allocation3 + $0x70] sm:$0xff]
    %v496 = vld [vmem:[#allocation3 + $0x78] sm:$0xff]
    %v497 = vld [vmem:[#allocation3 + $0x80] sm:$0xff]
    %v498 = vld [vmem:[#allocation3 + $0x88] sm:$0xff]
    %v499 = vld [vmem:[#allocation3 + $0x90] sm:$0xff]
    %v500 = vld [vmem:[#allocation3 + $0x98] sm:$0xff]
    %v501 = vld [vmem:[#allocation3 + $0xa0] sm:$0xff]
    %v502 = vld [vmem:[#allocation3 + $0xa8] sm:$0xff]
    %v503 = vld [vmem:[#allocation3 + $0xb0] sm:$0xff]
    %v504 = vld [vmem:[#allocation3 + $0xb8] sm:$0xff]
    %v505 = vld [vmem:[#allocation3 + $0xc0] sm:$0xff]
    %v506 = vld [vmem:[#allocation3 + $0xc8] sm:$0xff]
    %v507 = vld [vmem:[#allocation3 + $0xd0] sm:$0xff]
    %v508 = vld [vmem:[#allocation3 + $0xd8] sm:$0xff]
    %v509 = vld [vmem:[#allocation3 + $0xe0] sm:$0xff]
    %v510 = vld [vmem:[#allocation3 + $0xe8] sm:$0xff]
    %v511 = vld [vmem:[#allocation3 + $0xf0] sm:$0xff]
    %v512 = vld [vmem:[#allocation3 + $0xf8] sm:$0xff]
    %v513 = vpack.c.bf16 %v326, %v323
    %v514 = vpack.c.bf16 %v334, %v331
    %v515 = vpack.c.bf16 %v342, %v339
    %v516 = vpack.c.bf16 %v350, %v347
    %v517 = vpack.c.bf16 %v358, %v355
    %v518 = vpack.c.bf16 %v366, %v363
    %v519 = vpack.c.bf16 %v374, %v371
    %v520 = vpack.c.bf16 %v382, %v379
    %v521 = vpack.c.bf16 %v390, %v387
    %v522 = vpack.c.bf16 %v398, %v395
    %v523 = vpack.c.bf16 %v406, %v403
    %v524 = vpack.c.bf16 %v414, %v411
    %v525 = vpack.c.bf16 %v422, %v419
    %v526 = vpack.c.bf16 %v430, %v427
    %v527 = vpack.c.bf16 %v438, %v435
    %v528 = vpack.c.bf16 %v446, %v443
    %v561 = vunpack.c.l.b16 %v481
    %v562 = vunpack.c.h.b16 %v481
    %v563 = vunpack.c.l.b16 %v482
    %v564 = vunpack.c.h.b16 %v482
    %v565 = vunpack.c.l.b16 %v483
    %v566 = vunpack.c.h.b16 %v483
    %v567 = vunpack.c.l.b16 %v484
    %v568 = vunpack.c.h.b16 %v484
    %v569 = vunpack.c.l.b16 %v485
    %v570 = vunpack.c.h.b16 %v485
    %v571 = vunpack.c.l.b16 %v486
    %v572 = vunpack.c.h.b16 %v486
    %v573 = vunpack.c.l.b16 %v487
    %v574 = vunpack.c.h.b16 %v487
    %v575 = vunpack.c.l.b16 %v488
    %v576 = vunpack.c.h.b16 %v488
    %v577 = vunpack.c.l.b16 %v489
    %v578 = vunpack.c.h.b16 %v489
    %v579 = vunpack.c.l.b16 %v490
    %v580 = vunpack.c.h.b16 %v490
    %v581 = vunpack.c.l.b16 %v491
    %v582 = vunpack.c.h.b16 %v491
    %v583 = vunpack.c.l.b16 %v492
    %v584 = vunpack.c.h.b16 %v492
    %v585 = vunpack.c.l.b16 %v493
    %v586 = vunpack.c.h.b16 %v493
    %v587 = vunpack.c.l.b16 %v494
    %v588 = vunpack.c.h.b16 %v494
    %v589 = vunpack.c.l.b16 %v495
    %v590 = vunpack.c.h.b16 %v495
    %v591 = vunpack.c.l.b16 %v496
    %v592 = vunpack.c.h.b16 %v496
    %v593 = vunpack.c.l.b16 %v497
    %v594 = vunpack.c.h.b16 %v497
    %v595 = vunpack.c.l.b16 %v498
    %v596 = vunpack.c.h.b16 %v498
    %v597 = vunpack.c.l.b16 %v499
    %v598 = vunpack.c.h.b16 %v499
    %v599 = vunpack.c.l.b16 %v500
    %v600 = vunpack.c.h.b16 %v500
    %v601 = vunpack.c.l.b16 %v501
    %v602 = vunpack.c.h.b16 %v501
    %v603 = vunpack.c.l.b16 %v502
    %v604 = vunpack.c.h.b16 %v502
    %v605 = vunpack.c.l.b16 %v503
    %v606 = vunpack.c.h.b16 %v503
    %v607 = vunpack.c.l.b16 %v504
    %v608 = vunpack.c.h.b16 %v504
    %v609 = vunpack.c.l.b16 %v505
    %v610 = vunpack.c.h.b16 %v505
    %v611 = vunpack.c.l.b16 %v506
    %v612 = vunpack.c.h.b16 %v506
    %v613 = vunpack.c.l.b16 %v507
    %v614 = vunpack.c.h.b16 %v507
    %v615 = vunpack.c.l.b16 %v508
    %v616 = vunpack.c.h.b16 %v508
    %v617 = vunpack.c.l.b16 %v509
    %v618 = vunpack.c.h.b16 %v509
    %v619 = vunpack.c.l.b16 %v510
    %v620 = vunpack.c.h.b16 %v510
    %v621 = vunpack.c.l.b16 %v511
    %v622 = vunpack.c.h.b16 %v511
    %v623 = vunpack.c.l.b16 %v512
    %v624 = vunpack.c.h.b16 %v512
    %v625 = vpack.c.b16 %v563, %v561
    %v626 = vpack.c.b16 %v564, %v562
    %v627 = vpack.c.b16 %v567, %v565
    %v628 = vpack.c.b16 %v568, %v566
    %v629 = vpack.c.b16 %v571, %v569
    %v630 = vpack.c.b16 %v572, %v570
    %v631 = vpack.c.b16 %v575, %v573
    %v632 = vpack.c.b16 %v576, %v574
    %v633 = vpack.c.b16 %v579, %v577
    %v634 = vpack.c.b16 %v580, %v578
    %v635 = vpack.c.b16 %v583, %v581
    %v636 = vpack.c.b16 %v584, %v582
    %v637 = vpack.c.b16 %v587, %v585
    %v638 = vpack.c.b16 %v588, %v586
    %v639 = vpack.c.b16 %v591, %v589
    %v640 = vpack.c.b16 %v592, %v590
    %v641 = vpack.c.b16 %v595, %v593
    %v642 = vpack.c.b16 %v596, %v594
    %v643 = vpack.c.b16 %v599, %v597
    %v644 = vpack.c.b16 %v600, %v598
    %v645 = vpack.c.b16 %v603, %v601
    %v646 = vpack.c.b16 %v604, %v602
    %v647 = vpack.c.b16 %v607, %v605
    %v648 = vpack.c.b16 %v608, %v606
    %v649 = vpack.c.b16 %v611, %v609
    %v650 = vpack.c.b16 %v612, %v610
    %v651 = vpack.c.b16 %v615, %v613
    %v652 = vpack.c.b16 %v616, %v614
    %v653 = vpack.c.b16 %v619, %v617
    %v654 = vpack.c.b16 %v620, %v618
    %v655 = vpack.c.b16 %v623, %v621
    %v656 = vpack.c.b16 %v624, %v622
    %689 = vmatprep.subr.bf16.mxu0 0
    %690 = vmatpush1.bf16.msra.mxu0 %v513
    %691 = vmatprep.subr.bf16.mxu0 0
    %692 = vmatpush1.bf16.msra.mxu0 %v514
    %693 = vmatprep.subr.bf16.mxu0 0
    %694 = vmatpush1.bf16.msra.mxu0 %v515
    %695 = vmatprep.subr.bf16.mxu0 0
    %696 = vmatpush1.bf16.msra.mxu0 %v516
    %697 = vmatprep.subr.bf16.mxu0 0
    %698 = vmatpush1.bf16.msra.mxu0 %v517
    %699 = vmatprep.subr.bf16.mxu0 0
    %700 = vmatpush1.bf16.msra.mxu0 %v518
    %701 = vmatprep.subr.bf16.mxu0 0
    %702 = vmatpush1.bf16.msra.mxu0 %v519
    %703 = vmatprep.subr.bf16.mxu0 0
    %704 = vmatpush1.bf16.msra.mxu0 %v520
    %705 = vmatprep.subr.bf16.mxu0 0
    %706 = vmatpush1.bf16.msra.mxu0 %v521
    %707 = vmatprep.subr.bf16.mxu0 0
    %708 = vmatpush1.bf16.msra.mxu0 %v522
    %709 = vmatprep.subr.bf16.mxu0 0
    %710 = vmatpush1.bf16.msra.mxu0 %v523
    %711 = vmatprep.subr.bf16.mxu0 0
    %712 = vmatpush1.bf16.msra.mxu0 %v524
    %713 = vmatprep.subr.bf16.mxu0 0
    %714 = vmatpush1.bf16.msra.mxu0 %v525
    %715 = vmatprep.subr.bf16.mxu0 0
    %716 = vmatpush1.bf16.msra.mxu0 %v526
    %717 = vmatprep.subr.bf16.mxu0 0
    %718 = vmatpush1.bf16.msra.mxu0 %v527
    %719 = vmatprep.subr.bf16.mxu0 0
    %720 = vmatpush1.bf16.msra.mxu0 %v528
    %721 = vmatprep.mubr.bf16.mxu0 %v626
    %722 = vmatmul.mubr.bf16.gmra.mrb[0].mxu0 %v625
    %v723 = vpop.f32.mrb[0].mxu0
    %v724 = vadd.f32 0.0, %v723
    %v725 = vpop.f32.mrb[0].mxu0
    %v726 = vpop.f32.mrb[0].mxu0
    %v727 = vadd.f32 0.0, %v726
    %v728 = vpop.f32.mrb[0].mxu0
    %729 = vmatprep.mubr.bf16.mxu0 %v628
    %730 = vmatmul.mubr.bf16.gmra.mrb[0].mxu0 %v627
    %v731 = vpop.f32.mrb[0].mxu0
    %v732 = vadd.f32 0.0, %v731
    %v733 = vpop.f32.mrb[0].mxu0
    %v734 = vpop.f32.mrb[0].mxu0
    %v735 = vadd.f32 0.0, %v734
    %v736 = vpop.f32.mrb[0].mxu0
    %737 = vmatprep.mubr.bf16.mxu0 %v630
    %738 = vmatmul.mubr.bf16.gmra.mrb[0].mxu0 %v629
    %v739 = vpop.f32.mrb[0].mxu0
    %v740 = vadd.f32 0.0, %v739
    %v741 = vpop.f32.mrb[0].mxu0
    %v742 = vpop.f32.mrb[0].mxu0
    %v743 = vadd.f32 0.0, %v742
    %v744 = vpop.f32.mrb[0].mxu0
    %745 = vmatprep.mubr.bf16.mxu0 %v632
    %746 = vmatmul.mubr.bf16.gmra.mrb[0].mxu0 %v631
    %v747 = vpop.f32.mrb[0].mxu0
    %v748 = vadd.f32 0.0, %v747
    %v749 = vpop.f32.mrb[0].mxu0
    %v750 = vpop.f32.mrb[0].mxu0
    %v751 = vadd.f32 0.0, %v750
    %v752 = vpop.f32.mrb[0].mxu0
    %753 = vmatprep.mubr.bf16.mxu0 %v634
    %754 = vmatmul.mubr.bf16.gmra.mrb[0].mxu0 %v633
    %v755 = vpop.f32.mrb[0].mxu0
    %v756 = vadd.f32 0.0, %v755
    %v757 = vpop.f32.mrb[0].mxu0
    %v758 = vpop.f32.mrb[0].mxu0
    %v759 = vadd.f32 0.0, %v758
    %v760 = vpop.f32.mrb[0].mxu0
    %761 = vmatprep.mubr.bf16.mxu0 %v636
    %762 = vmatmul.mubr.bf16.gmra.mrb[0].mxu0 %v635
    %v763 = vpop.f32.mrb[0].mxu0
    %v764 = vadd.f32 0.0, %v763
    %v765 = vpop.f32.mrb[0].mxu0
    %v766 = vpop.f32.mrb[0].mxu0
    %v767 = vadd.f32 0.0, %v766
    %v768 = vpop.f32.mrb[0].mxu0
    %769 = vmatprep.mubr.bf16.mxu0 %v638
    %770 = vmatmul.mubr.bf16.gmra.mrb[0].mxu0 %v637
    %v771 = vpop.f32.mrb[0].mxu0
    %v772 = vadd.f32 0.0, %v771
    %v773 = vpop.f32.mrb[0].mxu0
    %v774 = vpop.f32.mrb[0].mxu0
    %v775 = vadd.f32 0.0, %v774
    %v776 = vpop.f32.mrb[0].mxu0
    %777 = vmatprep.mubr.bf16.mxu0 %v640
    %778 = vmatmul.mubr.bf16.gmra.mrb[0].mxu0 %v639
    %v779 = vpop.f32.mrb[0].mxu0
    %v780 = vadd.f32 0.0, %v779
    %v781 = vpop.f32.mrb[0].mxu0
    %v782 = vpop.f32.mrb[0].mxu0
    %v783 = vadd.f32 0.0, %v782
    %v784 = vpop.f32.mrb[0].mxu0
    %785 = vmatprep.mubr.bf16.mxu0 %v642
    %786 = vmatmul.mubr.bf16.gmra.mrb[0].mxu0 %v641
    %v787 = vpop.f32.mrb[0].mxu0
    %v788 = vadd.f32 0.0, %v787
    %v789 = vpop.f32.mrb[0].mxu0
    %v790 = vpop.f32.mrb[0].mxu0
    %v791 = vadd.f32 0.0, %v790
    %v792 = vpop.f32.mrb[0].mxu0
    %793 = vmatprep.mubr.bf16.mxu0 %v644
    %794 = vmatmul.mubr.bf16.gmra.mrb[0].mxu0 %v643
    %v795 = vpop.f32.mrb[0].mxu0
    %v796 = vadd.f32 0.0, %v795
    %v797 = vpop.f32.mrb[0].mxu0
    %v798 = vpop.f32.mrb[0].mxu0
    %v799 = vadd.f32 0.0, %v798
    %v800 = vpop.f32.mrb[0].mxu0
    %801 = vmatprep.mubr.bf16.mxu0 %v646
    %802 = vmatmul.mubr.bf16.gmra.mrb[0].mxu0 %v645
    %v803 = vpop.f32.mrb[0].mxu0
    %v804 = vadd.f32 0.0, %v803
    %v805 = vpop.f32.mrb[0].mxu0
    %v806 = vpop.f32.mrb[0].mxu0
    %v807 = vadd.f32 0.0, %v806
    %v808 = vpop.f32.mrb[0].mxu0
    %809 = vmatprep.mubr.bf16.mxu0 %v648
    %810 = vmatmul.mubr.bf16.gmra.mrb[0].mxu0 %v647
    %v811 = vpop.f32.mrb[0].mxu0
    %v812 = vadd.f32 0.0, %v811
    %v813 = vpop.f32.mrb[0].mxu0
    %v814 = vpop.f32.mrb[0].mxu0
    %v815 = vadd.f32 0.0, %v814
    %v816 = vpop.f32.mrb[0].mxu0
    %817 = vmatprep.mubr.bf16.mxu0 %v650
    %818 = vmatmul.mubr.bf16.gmra.mrb[0].mxu0 %v649
    %v819 = vpop.f32.mrb[0].mxu0
    %v820 = vadd.f32 0.0, %v819
    %v821 = vpop.f32.mrb[0].mxu0
    %v822 = vpop.f32.mrb[0].mxu0
    %v823 = vadd.f32 0.0, %v822
    %v824 = vpop.f32.mrb[0].mxu0
    %825 = vmatprep.mubr.bf16.mxu0 %v652
    %826 = vmatmul.mubr.bf16.gmra.mrb[0].mxu0 %v651
    %v827 = vpop.f32.mrb[0].mxu0
    %v828 = vadd.f32 0.0, %v827
    %v829 = vpop.f32.mrb[0].mxu0
    %v830 = vpop.f32.mrb[0].mxu0
    %v831 = vadd.f32 0.0, %v830
    %v832 = vpop.f32.mrb[0].mxu0
    %833 = vmatprep.mubr.bf16.mxu0 %v654
    %834 = vmatmul.mubr.bf16.gmra.mrb[0].mxu0 %v653
    %v835 = vpop.f32.mrb[0].mxu0
    %v836 = vadd.f32 0.0, %v835
    %v837 = vpop.f32.mrb[0].mxu0
    %v838 = vpop.f32.mrb[0].mxu0
    %v839 = vadd.f32 0.0, %v838
    %v840 = vpop.f32.mrb[0].mxu0
    %841 = vmatprep.mubr.bf16.mxu0 %v656
    %842 = vmatmul.mubr.bf16.gmra.mrb[0].mxu0 %v655
    %v843 = vpop.f32.mrb[0].mxu0
    %v844 = vadd.f32 0.0, %v843
    %v845 = vpop.f32.mrb[0].mxu0
    %v846 = vpop.f32.mrb[0].mxu0
    %v847 = vadd.f32 0.0, %v846
    %v848 = vpop.f32.mrb[0].mxu0
    %849 = vdwg.mxu0
    %v850 = vadd.f32 %v449, %v724
    %v851 = vadd.f32 %v450, %v727
    %v852 = vadd.f32 %v451, %v732
    %v853 = vadd.f32 %v452, %v735
    %v854 = vadd.f32 %v453, %v740
    %v855 = vadd.f32 %v454, %v743
    %v856 = vadd.f32 %v455, %v748
    %v857 = vadd.f32 %v456, %v751
    %v858 = vadd.f32 %v457, %v756
    %v859 = vadd.f32 %v458, %v759
    %v860 = vadd.f32 %v459, %v764
    %v861 = vadd.f32 %v460, %v767
    %v862 = vadd.f32 %v461, %v772
    %v863 = vadd.f32 %v462, %v775
    %v864 = vadd.f32 %v463, %v780
    %v865 = vadd.f32 %v464, %v783
    %v866 = vadd.f32 %v465, %v788
    %v867 = vadd.f32 %v466, %v791
    %v868 = vadd.f32 %v467, %v796
    %v869 = vadd.f32 %v468, %v799
    %v870 = vadd.f32 %v469, %v804
    %v871 = vadd.f32 %v470, %v807
    %v872 = vadd.f32 %v471, %v812
    %v873 = vadd.f32 %v472, %v815
    %v874 = vadd.f32 %v473, %v820
    %v875 = vadd.f32 %v474, %v823
    %v876 = vadd.f32 %v475, %v828
    %v877 = vadd.f32 %v476, %v831
    %v878 = vadd.f32 %v477, %v836
    %v879 = vadd.f32 %v478, %v839
    %v880 = vadd.f32 %v479, %v844
    %v881 = vadd.f32 %v480, %v847
    %882 = vst [vmem:[#allocation2] sm:$0xff] %v850
    %883 = vst [vmem:[#allocation2 + $0x8] sm:$0xff] %v851
    %884 = vst [vmem:[#allocation2 + $0x10] sm:$0xff] %v852
    %885 = vst [vmem:[#allocation2 + $0x18] sm:$0xff] %v853
    %886 = vst [vmem:[#allocation2 + $0x20] sm:$0xff] %v854
    %887 = vst [vmem:[#allocation2 + $0x28] sm:$0xff] %v855
    %888 = vst [vmem:[#allocation2 + $0x30] sm:$0xff] %v856
    %889 = vst [vmem:[#allocation2 + $0x38] sm:$0xff] %v857
    %890 = vst [vmem:[#allocation2 + $0x40] sm:$0xff] %v858
    %891 = vst [vmem:[#allocation2 + $0x48] sm:$0xff] %v859
    %892 = vst [vmem:[#allocation2 + $0x50] sm:$0xff] %v860
    %893 = vst [vmem:[#allocation2 + $0x58] sm:$0xff] %v861
    %894 = vst [vmem:[#allocation2 + $0x60] sm:$0xff] %v862
    %895 = vst [vmem:[#allocation2 + $0x68] sm:$0xff] %v863
    %896 = vst [vmem:[#allocation2 + $0x70] sm:$0xff] %v864
    %897 = vst [vmem:[#allocation2 + $0x78] sm:$0xff] %v865
    %898 = vst [vmem:[#allocation2 + $0x80] sm:$0xff] %v866
    %899 = vst [vmem:[#allocation2 + $0x88] sm:$0xff] %v867
    %900 = vst [vmem:[#allocation2 + $0x90] sm:$0xff] %v868
    %901 = vst [vmem:[#allocation2 + $0x98] sm:$0xff] %v869
    %902 = vst [vmem:[#allocation2 + $0xa0] sm:$0xff] %v870
    %903 = vst [vmem:[#allocation2 + $0xa8] sm:$0xff] %v871
    %904 = vst [vmem:[#allocation2 + $0xb0] sm:$0xff] %v872
    %905 = vst [vmem:[#allocation2 + $0xb8] sm:$0xff] %v873
    %906 = vst [vmem:[#allocation2 + $0xc0] sm:$0xff] %v874
    %907 = vst [vmem:[#allocation2 + $0xc8] sm:$0xff] %v875
    %908 = vst [vmem:[#allocation2 + $0xd0] sm:$0xff] %v876
    %909 = vst [vmem:[#allocation2 + $0xd8] sm:$0xff] %v877
    %910 = vst [vmem:[#allocation2 + $0xe0] sm:$0xff] %v878
    %911 = vst [vmem:[#allocation2 + $0xe8] sm:$0xff] %v879
    %912 = vst [vmem:[#allocation2 + $0xf0] sm:$0xff] %v880
    %913 = vst [vmem:[#allocation2 + $0xf8] sm:$0xff] %v881
    // Predicated region
    $region34: #{tpu_custom_call.1} parent=1 // pred_check
      %p914 = pneg %p60
    $region35: #{tpu_custom_call.1} parent=1 // pred_check_branch
      %916 = sbr.rel (%p914) target = $region37
    $region36: #{tpu_custom_call.1} parent=1 // pred_region
      %v917 = vld [vmem:[#allocation2] sm:$0xff]
      %v918 = vld [vmem:[#allocation2 + $0x8] sm:$0xff]
      %v919 = vld [vmem:[#allocation2 + $0x10] sm:$0xff]
      %v920 = vld [vmem:[#allocation2 + $0x18] sm:$0xff]
      %v921 = vld [vmem:[#allocation2 + $0x20] sm:$0xff]
      %v922 = vld [vmem:[#allocation2 + $0x28] sm:$0xff]
      %v923 = vld [vmem:[#allocation2 + $0x30] sm:$0xff]
      %v924 = vld [vmem:[#allocation2 + $0x38] sm:$0xff]
      %v925 = vld [vmem:[#allocation2 + $0x40] sm:$0xff]
      %v926 = vld [vmem:[#allocation2 + $0x48] sm:$0xff]
      %v927 = vld [vmem:[#allocation2 + $0x50] sm:$0xff]
      %v928 = vld [vmem:[#allocation2 + $0x58] sm:$0xff]
      %v929 = vld [vmem:[#allocation2 + $0x60] sm:$0xff]
      %v930 = vld [vmem:[#allocation2 + $0x68] sm:$0xff]
      %v931 = vld [vmem:[#allocation2 + $0x70] sm:$0xff]
      %v932 = vld [vmem:[#allocation2 + $0x78] sm:$0xff]
      %v933 = vld [vmem:[#allocation2 + $0x80] sm:$0xff]
      %v934 = vld [vmem:[#allocation2 + $0x88] sm:$0xff]
      %v935 = vld [vmem:[#allocation2 + $0x90] sm:$0xff]
      %v936 = vld [vmem:[#allocation2 + $0x98] sm:$0xff]
      %v937 = vld [vmem:[#allocation2 + $0xa0] sm:$0xff]
      %v938 = vld [vmem:[#allocation2 + $0xa8] sm:$0xff]
      %v939 = vld [vmem:[#allocation2 + $0xb0] sm:$0xff]
      %v940 = vld [vmem:[#allocation2 + $0xb8] sm:$0xff]
      %v941 = vld [vmem:[#allocation2 + $0xc0] sm:$0xff]
      %v942 = vld [vmem:[#allocation2 + $0xc8] sm:$0xff]
      %v943 = vld [vmem:[#allocation2 + $0xd0] sm:$0xff]
      %v944 = vld [vmem:[#allocation2 + $0xd8] sm:$0xff]
      %v945 = vld [vmem:[#allocation2 + $0xe0] sm:$0xff]
      %v946 = vld [vmem:[#allocation2 + $0xe8] sm:$0xff]
      %v947 = vld [vmem:[#allocation2 + $0xf0] sm:$0xff]
      %v948 = vld [vmem:[#allocation2 + $0xf8] sm:$0xff]
      %v949 = vld [vmem:[%s3] sm:$0x1]
      %v951 = vlaneseq
      %v952 = vshrl.u32 %v951, 7
      %v953 = vsub.s32 0, %v952
      %v954 = vrot.slane %v949, %v953
      %v956 = vadd.f32 %v917, %v954
      %v957 = vadd.f32 %v918, %v954
      %v958 = vadd.f32 %v919, %v954
      %v959 = vadd.f32 %v920, %v954
      %v960 = vadd.f32 %v921, %v954
      %v961 = vadd.f32 %v922, %v954
      %v962 = vadd.f32 %v923, %v954
      %v963 = vadd.f32 %v924, %v954
      %v964 = vadd.f32 %v925, %v954
      %v965 = vadd.f32 %v926, %v954
      %v966 = vadd.f32 %v927, %v954
      %v967 = vadd.f32 %v928, %v954
      %v968 = vadd.f32 %v929, %v954
      %v969 = vadd.f32 %v930, %v954
      %v970 = vadd.f32 %v931, %v954
      %v971 = vadd.f32 %v932, %v954
      %v972 = vadd.f32 %v933, %v954
      %v973 = vadd.f32 %v934, %v954
      %v974 = vadd.f32 %v935, %v954
      %v975 = vadd.f32 %v936, %v954
      %v976 = vadd.f32 %v937, %v954
      %v977 = vadd.f32 %v938, %v954
      %v978 = vadd.f32 %v939, %v954
      %v979 = vadd.f32 %v940, %v954
      %v980 = vadd.f32 %v941, %v954
      %v981 = vadd.f32 %v942, %v954
      %v982 = vadd.f32 %v943, %v954
      %v983 = vadd.f32 %v944, %v954
      %v984 = vadd.f32 %v945, %v954
      %v985 = vadd.f32 %v946, %v954
      %v986 = vadd.f32 %v947, %v954
      %v987 = vadd.f32 %v948, %v954
      %v988 = vmax.f32 %v956, 0.0
      %v989 = vmax.f32 %v957, 0.0
      %v990 = vmax.f32 %v958, 0.0
      %v991 = vmax.f32 %v959, 0.0
      %v992 = vmax.f32 %v960, 0.0
      %v993 = vmax.f32 %v961, 0.0
      %v994 = vmax.f32 %v962, 0.0
      %v995 = vmax.f32 %v963, 0.0
      %v996 = vmax.f32 %v964, 0.0
      %v997 = vmax.f32 %v965, 0.0
      %v998 = vmax.f32 %v966, 0.0
      %v999 = vmax.f32 %v967, 0.0
      %v1000 = vmax.f32 %v968, 0.0
      %v1001 = vmax.f32 %v969, 0.0
      %v1002 = vmax.f32 %v970, 0.0
      %v1003 = vmax.f32 %v971, 0.0
      %v1004 = vmax.f32 %v972, 0.0
      %v1005 = vmax.f32 %v973, 0.0
      %v1006 = vmax.f32 %v974, 0.0
      %v1007 = vmax.f32 %v975, 0.0
      %v1008 = vmax.f32 %v976, 0.0
      %v1009 = vmax.f32 %v977, 0.0
      %v1010 = vmax.f32 %v978, 0.0
      %v1011 = vmax.f32 %v979, 0.0
      %v1012 = vmax.f32 %v980, 0.0
      %v1013 = vmax.f32 %v981, 0.0
      %v1014 = vmax.f32 %v982, 0.0
      %v1015 = vmax.f32 %v983, 0.0
      %v1016 = vmax.f32 %v984, 0.0
      %v1017 = vmax.f32 %v985, 0.0
      %v1018 = vmax.f32 %v986, 0.0
      %v1019 = vmax.f32 %v987, 0.0
      %v1020 = vpack.c.bf16 %v989, %v988
      %v1021 = vpack.c.bf16 %v991, %v990
      %v1022 = vpack.c.bf16 %v993, %v992
      %v1023 = vpack.c.bf16 %v995, %v994
      %v1024 = vpack.c.bf16 %v997, %v996
      %v1025 = vpack.c.bf16 %v999, %v998
      %v1026 = vpack.c.bf16 %v1001, %v1000
      %v1027 = vpack.c.bf16 %v1003, %v1002
      %v1028 = vpack.c.bf16 %v1005, %v1004
      %v1029 = vpack.c.bf16 %v1007, %v1006
      %v1030 = vpack.c.bf16 %v1009, %v1008
      %v1031 = vpack.c.bf16 %v1011, %v1010
      %v1032 = vpack.c.bf16 %v1013, %v1012
      %v1033 = vpack.c.bf16 %v1015, %v1014
      %v1034 = vpack.c.bf16 %v1017, %v1016
      %v1035 = vpack.c.bf16 %v1019, %v1018
      %v1052 = vunpack.c.l.b16 %v1020
      %v1053 = vunpack.c.h.b16 %v1020
      %v1054 = vunpack.c.l.b16 %v1021
      %v1055 = vunpack.c.h.b16 %v1021
      %v1056 = vunpack.c.l.b16 %v1022
      %v1057 = vunpack.c.h.b16 %v1022
      %v1058 = vunpack.c.l.b16 %v1023
      %v1059 = vunpack.c.h.b16 %v1023
      %v1060 = vunpack.c.l.b16 %v1024
      %v1061 = vunpack.c.h.b16 %v1024
      %v1062 = vunpack.c.l.b16 %v1025
      %v1063 = vunpack.c.h.b16 %v1025
      %v1064 = vunpack.c.l.b16 %v1026
      %v1065 = vunpack.c.h.b16 %v1026
      %v1066 = vunpack.c.l.b16 %v1027
      %v1067 = vunpack.c.h.b16 %v1027
      %v1068 = vunpack.c.l.b16 %v1028
      %v1069 = vunpack.c.h.b16 %v1028
      %v1070 = vunpack.c.l.b16 %v1029
      %v1071 = vunpack.c.h.b16 %v1029
      %v1072 = vunpack.c.l.b16 %v1030
      %v1073 = vunpack.c.h.b16 %v1030
      %v1074 = vunpack.c.l.b16 %v1031
      %v1075 = vunpack.c.h.b16 %v1031
      %v1076 = vunpack.c.l.b16 %v1032
      %v1077 = vunpack.c.h.b16 %v1032
      %v1078 = vunpack.c.l.b16 %v1033
      %v1079 = vunpack.c.h.b16 %v1033
      %v1080 = vunpack.c.l.b16 %v1034
      %v1081 = vunpack.c.h.b16 %v1034
      %v1082 = vunpack.c.l.b16 %v1035
      %v1083 = vunpack.c.h.b16 %v1035
      %v1084 = vpack.c.b16 %v1052, %v1052
      %v1085 = vpack.c.b16 %v1053, %v1053
      %v1086 = vpack.c.b16 %v1054, %v1054
      %v1087 = vpack.c.b16 %v1055, %v1055
      %v1088 = vpack.c.b16 %v1056, %v1056
      %v1089 = vpack.c.b16 %v1057, %v1057
      %v1090 = vpack.c.b16 %v1058, %v1058
      %v1091 = vpack.c.b16 %v1059, %v1059
      %v1092 = vpack.c.b16 %v1060, %v1060
      %v1093 = vpack.c.b16 %v1061, %v1061
      %v1094 = vpack.c.b16 %v1062, %v1062
      %v1095 = vpack.c.b16 %v1063, %v1063
      %v1096 = vpack.c.b16 %v1064, %v1064
      %v1097 = vpack.c.b16 %v1065, %v1065
      %v1098 = vpack.c.b16 %v1066, %v1066
      %v1099 = vpack.c.b16 %v1067, %v1067
      %v1100 = vpack.c.b16 %v1068, %v1068
      %v1101 = vpack.c.b16 %v1069, %v1069
      %v1102 = vpack.c.b16 %v1070, %v1070
      %v1103 = vpack.c.b16 %v1071, %v1071
      %v1104 = vpack.c.b16 %v1072, %v1072
      %v1105 = vpack.c.b16 %v1073, %v1073
      %v1106 = vpack.c.b16 %v1074, %v1074
      %v1107 = vpack.c.b16 %v1075, %v1075
      %v1108 = vpack.c.b16 %v1076, %v1076
      %v1109 = vpack.c.b16 %v1077, %v1077
      %v1110 = vpack.c.b16 %v1078, %v1078
      %v1111 = vpack.c.b16 %v1079, %v1079
      %v1112 = vpack.c.b16 %v1080, %v1080
      %v1113 = vpack.c.b16 %v1081, %v1081
      %v1114 = vpack.c.b16 %v1082, %v1082
      %v1115 = vpack.c.b16 %v1083, %v1083
      %1148 = vst [vmem:[#allocation9] sm:$0xf] %v1084
      %1149 = vst [vmem:[#allocation9 + $0x4] sm:$0xf] %v1085
      %1150 = vst [vmem:[#allocation9 + $0x8] sm:$0xf] %v1086
      %1151 = vst [vmem:[#allocation9 + $0xc] sm:$0xf] %v1087
      %1152 = vst [vmem:[#allocation9 + $0x10] sm:$0xf] %v1088
      %1153 = vst [vmem:[#allocation9 + $0x14] sm:$0xf] %v1089
      %1154 = vst [vmem:[#allocation9 + $0x18] sm:$0xf] %v1090
      %1155 = vst [vmem:[#allocation9 + $0x1c] sm:$0xf] %v1091
      %1156 = vst [vmem:[#allocation9 + $0x20] sm:$0xf] %v1092
      %1157 = vst [vmem:[#allocation9 + $0x24] sm:$0xf] %v1093
      %1158 = vst [vmem:[#allocation9 + $0x28] sm:$0xf] %v1094
      %1159 = vst [vmem:[#allocation9 + $0x2c] sm:$0xf] %v1095
      %1160 = vst [vmem:[#allocation9 + $0x30] sm:$0xf] %v1096
      %1161 = vst [vmem:[#allocation9 + $0x34] sm:$0xf] %v1097
      %1162 = vst [vmem:[#allocation9 + $0x38] sm:$0xf] %v1098
      %1163 = vst [vmem:[#allocation9 + $0x3c] sm:$0xf] %v1099
      %1164 = vst [vmem:[#allocation9 + $0x40] sm:$0xf] %v1100
      %1165 = vst [vmem:[#allocation9 + $0x44] sm:$0xf] %v1101
      %1166 = vst [vmem:[#allocation9 + $0x48] sm:$0xf] %v1102
      %1167 = vst [vmem:[#allocation9 + $0x4c] sm:$0xf] %v1103
      %1168 = vst [vmem:[#allocation9 + $0x50] sm:$0xf] %v1104
      %1169 = vst [vmem:[#allocation9 + $0x54] sm:$0xf] %v1105
      %1170 = vst [vmem:[#allocation9 + $0x58] sm:$0xf] %v1106
      %1171 = vst [vmem:[#allocation9 + $0x5c] sm:$0xf] %v1107
      %1172 = vst [vmem:[#allocation9 + $0x60] sm:$0xf] %v1108
      %1173 = vst [vmem:[#allocation9 + $0x64] sm:$0xf] %v1109
      %1174 = vst [vmem:[#allocation9 + $0x68] sm:$0xf] %v1110
      %1175 = vst [vmem:[#allocation9 + $0x6c] sm:$0xf] %v1111
      %1176 = vst [vmem:[#allocation9 + $0x70] sm:$0xf] %v1112
      %1177 = vst [vmem:[#allocation9 + $0x74] sm:$0xf] %v1113
      %1178 = vst [vmem:[#allocation9 + $0x78] sm:$0xf] %v1114
      %1179 = vst [vmem:[#allocation9 + $0x7c] sm:$0xf] %v1115
    $region37: #{tpu_custom_call.1} parent=1 // pred_fallthru
      _
    // Predicated region
    $region38: #{tpu_custom_call.1} parent=1 // pred_check
      _
    $region39: #{tpu_custom_call.1} parent=1 // pred_check_branch
      %1181 = sbr.rel (0) target = $region41
    $region40: #{tpu_custom_call.1} parent=1 // pred_region
      %s1183 = ssub.s32 2048, 2048
      %1184 = vsyncadd [#allocation5], %s1183
      %s1185 = sshll.u32 [#allocation9], 4
      %s1186 = int_to_ptr.vmem [resolvable:$true] %s1185
      %1191 = dma.vmem_to_hbm [thread:$0]  %s1186, 2048, %s4, [#allocation5], 64, 64, 4
    $region41: #{tpu_custom_call.1} parent=1 // pred_fallthru
      _
    // Predicated region
    $region42: #{tpu_custom_call.1} parent=1 // pred_check
      _
    $region43: #{tpu_custom_call.1} parent=1 // pred_check_branch
      %1193 = sbr.rel (0) target = $region45
    $region44: #{tpu_custom_call.1} parent=1 // pred_region
      %1194 = dma.done [#allocation5], 2048
    $region45: #{tpu_custom_call.1} parent=1 // pred_fallthru
      _
    %1195 = vsyncpa [#allocation4], 1
    %1196 = vsyncpa [#allocation7], 1
    %1197 = vsyncpa [#allocation5], 1

</llo_original>
